<compile_context>
chip_gen: v7x
topology: tpu7x:2x2x1
jax: 0.10.0
libtpu: 0.0.40
codegen_flags: <defaults>
</compile_context>

<pallas_src>
import functools

import numpy as np
import jax
import jax.numpy as jnp
from jax.experimental import pallas as pl
from jax.experimental.pallas import tpu as pltpu


def _build_pe(d_model: int, max_len: int, dtype=jnp.float32) -> jnp.ndarray:
    """Deterministic sinusoidal positional-encoding buffer, shape (max_len, 1, d_model)."""
    position = np.arange(max_len, dtype=np.float64)[:, None]                  # (max_len, 1)
    div_term = np.exp(np.arange(0, d_model, 2, dtype=np.float64)
                      * (-np.log(10000.0) / d_model))                         # (ceil(d/2),)
    pe = np.zeros((max_len, 1, d_model), dtype=np.float64)
    pe[:, 0, 0::2] = np.sin(position * div_term)
    pe[:, 0, 1::2] = np.cos(position * div_term)[:, : d_model // 2]
    return jnp.asarray(pe, dtype=dtype)


def _pe_add_kernel(x_ref, pe_ref, o_ref, *, batch: int):
    # x_ref/o_ref: (ts, B*D)    pe_ref: (ts, D)
    pe_row = pe_ref[...]
    if batch == 1:
        pe_tiled = pe_row
    else:
        # Lane-replicate pe across the batch so the add + store are one wide,
        # lane-dense op.  This is VPU/XLU filler; the kernel is HBM bound.
        pe_tiled = jnp.concatenate([pe_row] * batch, axis=-1)     # (ts, B*D)
    o_ref[...] = (x_ref[...] + pe_tiled).astype(o_ref.dtype)


def _choose_seq_tile(S: int, B: int, D: int, itemsize: int) -> int:
    """Pick the sequence-tile length.

    VMEM resident per grid step ~= 2 pipeline buffers * (x tile + out tile +
    pe tile) plus ~1 tile of compute temporaries.  Budget conservatively so
    the default scoped-VMEM limit works on every TPU generation without
    raising vmem_limit_bytes (v5e 16 MiB, v6e 32 MiB, v7x 32 MiB scoped).
    """
    vmem_budget = 12 * 1024 * 1024
    bytes_per_pos = (3 * B * D + D) * itemsize          # x + out + tiled-pe temp + pe
    ts_vmem = max(1, vmem_budget // (2 * bytes_per_pos))
    # Aim for >= 4 grid steps when S allows: DMA/compute overlap + megacore
    # sharding of the "parallel" axis on v7x.
    ts_steps = max(8, pl.cdiv(S, 4))
    ts = min(S, ts_vmem, ts_steps)
    if ts < S:
        # Partial-S tiles: keep the sublane block dim a multiple of 8.
        ts = max(8, (ts // 8) * 8)
    return ts


def positional_encoding(x: jnp.ndarray, pe: jnp.ndarray) -> jnp.ndarray:
    """x: (S, B, D); pe: (max_len, 1, D).  Returns x + pe[:S] (same dtype as x)."""
    S, B, D = x.shape
    max_len = pe.shape[0]
    if S > max_len:
        raise ValueError(f"sequence length {S} exceeds pe max_len {max_len}")

    # One-time, tiny host-side preps (no per-call slicing of pe):
    pe2 = pe.reshape(max_len, D).astype(x.dtype)        # (max_len, D), cast once to x.dtype
    x2 = x.reshape(S, B * D)                            # free row-major flatten -> lane-dense

    itemsize = jnp.dtype(x.dtype).itemsize
    ts = _choose_seq_tile(S, B, D, itemsize)
    grid = (pl.cdiv(S, ts),)

    out2 = pl.pallas_call(
        functools.partial(_pe_add_kernel, batch=B),
        out_shape=jax.ShapeDtypeStruct((S, B * D), x.dtype),
        grid_spec=pltpu.PrefetchScalarGridSpec(
            num_scalar_prefetch=0,
            grid=grid,
            in_specs=[
                pl.BlockSpec((ts, B * D), lambda i: (i, 0)),   # x tile (lane-dense)
                pl.BlockSpec((ts, D), lambda i: (i, 0)),       # matching pe rows only
            ],
            out_specs=pl.BlockSpec((ts, B * D), lambda i: (i, 0)),
        ),
        compiler_params=pltpu.CompilerParams(
            dimension_semantics=("parallel",),                 # megacore sharding on v7x
        ),
    )(x2, pe2)

    return out2.reshape(S, B, D)


if __name__ == "__main__":
    key = jax.random.PRNGKey(0)
    k0, k1 = jax.random.split(key)

    # --- small shapes consistent with the module: seq=8, batch=2, d_model=32 ---
    S, B, D = 8, 2, 32
    max_len = 64
    x = jax.random.normal(k0, (S, B, D), dtype=jnp.float32)
    pe = _build_pe(D, max_len, dtype=jnp.float32)
    out = jax.block_until_ready(positional_encoding(x, pe))
    ref = x + pe[:S]
    np.testing.assert_allclose(np.asarray(out), np.asarray(ref), rtol=1e-6, atol=1e-6)

    # --- modest larger shape: exercises S-tiling (grid > 1) and lane-dense (B*D=512) blocks ---
    S2, B2, D2 = 256, 4, 128
    max_len2 = 512
    x_big = jax.random.normal(k1, (S2, B2, D2), dtype=jnp.float32)
    pe_big = _build_pe(D2, max_len2, dtype=jnp.float32)
    out_big = jax.block_until_ready(positional_encoding(x_big, pe_big))
    ref_big = x_big + pe_big[:S2]
    np.testing.assert_allclose(np.asarray(out_big), np.asarray(ref_big), rtol=1e-6, atol=1e-6)

    # --- bf16 activations: pe is cast once in the wrapper; add/store stay in bf16 ---
    x_bf16 = x_big.astype(jnp.bfloat16)
    out_bf16 = jax.block_until_ready(positional_encoding(x_bf16, pe_big))
    ref_bf16 = x_bf16 + pe_big[:S2].astype(jnp.bfloat16)
    np.testing.assert_allclose(np.asarray(out_bf16.astype(jnp.float32)),
                               np.asarray(ref_bf16.astype(jnp.float32)),
                               rtol=1e-2, atol=1e-2)

    print("KERNEL_OK")
</pallas_src>

<mosaic_0001>
module attributes {stable_mosaic.version = 11 : i64} {
  func.func @_pe_add_kernel(%arg0: i32, %arg1: memref<8x64xf32, #tpu.memory_space<vmem>>, %arg2: memref<8x32xf32, #tpu.memory_space<vmem>>, %arg3: memref<8x64xf32, #tpu.memory_space<vmem>>) attributes {dimension_semantics = [#tpu.dimension_semantics<parallel>], iteration_bounds = array<i64: 1>, scalar_prefetch = 0 : i64, scratch_operands = 0 : i64, tpu.core_type = #tpu.core_type<tc>, window_params = [{transform_indices = @transform_0, window_bounds = array<i64: 8, 64>}, {transform_indices = @transform_1, window_bounds = array<i64: 8, 32>}, {transform_indices = @transform_2, window_bounds = array<i64: 8, 64>}]} {
    %c0 = arith.constant 0 : index
    %c0_0 = arith.constant 0 : index
    %0 = vector.load %arg2[%c0, %c0_0] : memref<8x32xf32, #tpu.memory_space<vmem>>, vector<8x32xf32>
    %1 = tpu.concatenate %0, %0 in 1 : vector<8x32xf32>, vector<8x32xf32> -> vector<8x64xf32>
    %c0_1 = arith.constant 0 : index
    %c0_2 = arith.constant 0 : index
    %2 = vector.load %arg1[%c0_1, %c0_2] : memref<8x64xf32, #tpu.memory_space<vmem>>, vector<8x64xf32>
    %3 = arith.addf %2, %1 : vector<8x64xf32>
    %c0_3 = arith.constant 0 : index
    %c0_4 = arith.constant 0 : index
    %4 = vector.load %arg3[%c0_3, %c0_4] : memref<8x64xf32, #tpu.memory_space<vmem>>, vector<8x64xf32>
    tpu.vector_store %arg3[%c0_3, %c0_4], %3 {strides = array<i32>} : memref<8x64xf32, #tpu.memory_space<vmem>>, vector<8x64xf32>,
    return
  }
  func.func @transform_0(%arg0: i32) -> (i32, i32) {
    %c0_i32 = arith.constant 0 : i32
    %c0_i32_0 = arith.constant 0 : i32
    return %arg0, %c0_i32 : i32, i32
  }
  func.func @transform_1(%arg0: i32) -> (i32, i32) {
    %c0_i32 = arith.constant 0 : i32
    %c0_i32_0 = arith.constant 0 : i32
    return %arg0, %c0_i32 : i32, i32
  }
  func.func @transform_2(%arg0: i32) -> (i32, i32) {
    %c0_i32 = arith.constant 0 : i32
    %c0_i32_0 = arith.constant 0 : i32
    return %arg0, %c0_i32 : i32, i32
  }
}

</mosaic_0001>

<llo_original>
// kernel: tpu_custom_call.1
$region0: #{tpu_custom_call.1}
  #allocation0 [shape = 'u32[]', space=smem, size = 0x4, offset = 0x4, fixed_abs, tag = 'smem constant byte address 0x4 - core index']
  #allocation1 [shape = 'u32[144,128]{1,0:T(1,128)}', space=vmem, size = 0x12000, scoped, tag = 'internal scratch']
  %s0 = inlined_call_operand.vmem [shape: f32[8,64], index: 0, kind: input, shape index: {}]
  %s1 = inlined_call_operand.vmem [shape: f32[64,32], index: 1, kind: input, shape index: {}]
  %s2 = inlined_call_operand.hbm [shape: f32[8,64], index: 2, kind: output, shape index: {}]
  %s3 = sld [smem:[#allocation0]]
  $region18: #{tpu_custom_call.1} parent=0
    _
  %s5 = ssub.s32 1, %s3
  %s6 = scalar_select 0, %s5, %s3
  $region1: #{tpu_custom_call.1} parent=0
    #allocation2 [shape = 'u8[4096]{0}', space=vmem, size = 0x1000, scoped, tag = 'output window, operand 0, single buffered']
    #allocation3 [shape = 's32[1]{0}', space=sflag, size = 0x4, scoped, tag = 'scoped memory for tpu_custom_call.1']
    %7 = vsyncpa [#allocation3], 0
    // Predicated region
    $region2: #{tpu_custom_call.1} parent=1 // pred_check
      _
    $region3: #{tpu_custom_call.1} parent=1 // pred_check_branch
      %9 = sbr.rel (0) target = $region5
    $region4: #{tpu_custom_call.1} parent=1 // pred_region
      _
    $region5: #{tpu_custom_call.1} parent=1 // pred_fallthru
      _
    // Predicated region
    $region6: #{tpu_custom_call.1} parent=1 // pred_check
      _
    $region7: #{tpu_custom_call.1} parent=1 // pred_check_branch
      %11 = sbr.rel (0) target = $region9
    $region8: #{tpu_custom_call.1} parent=1 // pred_region
      _
    $region9: #{tpu_custom_call.1} parent=1 // pred_fallthru
      _
    %v12 = vld [vmem:[%s1] sm:$0xff]
    %14 = vrot.lane.b32.xlu0 %v12, 32
    %v15 = vpop.permute.xlu0 %14
    %vm17 = vcmask 261120
    %v18 = vsel %vm17, %v12, %v15
    %v19 = vld [vmem:[%s0] sm:$0xff]
    %v20 = vadd.f32 %v19, %v18
    %vm21 = vcmask 523264
    %22 = vst.msk [vmem:[#allocation2] sm:$0xff] %vm21, %v20
    // Predicated region
    $region10: #{tpu_custom_call.1} parent=1 // pred_check
      _
    $region11: #{tpu_custom_call.1} parent=1 // pred_check_branch
      %24 = sbr.rel (0) target = $region13
    $region12: #{tpu_custom_call.1} parent=1 // pred_region
      %s26 = ssub.s32 128, 128
      %27 = vsyncadd [#allocation3], %s26
      %s29 = sshll.u32 [#allocation2], 4
      %s30 = int_to_ptr.vmem [resolvable:$true] %s29
      %32 = dma.vmem_to_hbm [thread:$0]  %s30, 128, %s2, [#allocation3]
    $region13: #{tpu_custom_call.1} parent=1 // pred_fallthru
      _
    // Predicated region
    $region14: #{tpu_custom_call.1} parent=1 // pred_check
      _
    $region15: #{tpu_custom_call.1} parent=1 // pred_check_branch
      %34 = sbr.rel (0) target = $region17
    $region16: #{tpu_custom_call.1} parent=1 // pred_region
      %35 = dma.done [#allocation3], 128
    $region17: #{tpu_custom_call.1} parent=1 // pred_fallthru
      _
    %36 = vsyncpa [#allocation3], 1

</llo_original>
